<compile_context>
chip_gen: v5e
topology: v5e:2x2
jax: 0.10.0
libtpu: 0.0.40
codegen_flags: <defaults>
</compile_context>

<pallas_src>
import jax
import jax.numpy as jnp
from jax.experimental import pallas as pl
from jax.experimental.pallas import tpu as pltpu


def _round_up(x, m):
    return pl.cdiv(x, m) * m


def _make_mlp_kernel(compute_dtype):
    def mlp_kernel(x_ref, w1_ref, b1_ref, w2_ref, b2_ref, o_ref):
        # In-kernel operand cast (no-op when compute_dtype == x dtype): avoids a
        # separate wrapper-side HBM read+write cast pass before the kernel.
        x = x_ref[...].astype(compute_dtype)                         # (TB, I)
        h = jnp.dot(x, w1_ref[...],
                    preferred_element_type=jnp.float32)              # (TB, Hp) f32
        h = jnp.maximum(h + b1_ref[...], 0.0)                        # bias + ReLU, f32
        h = h.astype(compute_dtype)
        o = jnp.dot(h, w2_ref[...],
                    preferred_element_type=jnp.float32) + b2_ref[...]  # (TB, O) f32
        o_ref[...] = o.astype(o_ref.dtype)                           # lean (TB, O) store
    return mlp_kernel


def prepare_params(w1, b1, w2, b2, operand_dtype=jnp.float32):
    """One-time prep (outside the MAML hot path).

    PyTorch layout in: w1 (H, I), b1 (H,), w2 (O, H), b2 (O,).
    Out: w1_t (I, Hp), b1_r (1, Hp), w2_t (Hp, O), b2_r (1, O) with Hp = H
    zero-padded to a multiple of 128 lanes.  Padding is exact: padded hidden
    units are 0 after ReLU and contribute nothing to the second matmul.
    The output dim O is deliberately NOT padded (keeps HBM writes minimal).
    """
    H, I = w1.shape
    O = w2.shape[0]
    Hp = _round_up(H, 128)

    w1_t = jnp.zeros((I, Hp), operand_dtype).at[:, :H].set(w1.T.astype(operand_dtype))
    b1_r = jnp.zeros((1, Hp), jnp.float32).at[:, :H].set(b1.astype(jnp.float32))
    w2_t = w2.T.astype(operand_dtype)                       # (H, O)
    if Hp != H:
        w2_t = jnp.pad(w2_t, ((0, Hp - H), (0, 0)))         # (Hp, O)
    b2_r = b2.astype(jnp.float32).reshape(1, O)
    return w1_t, b1_r, w2_t, b2_r


def _choose_batch_tile(B, block_b, min_steps=2):
    """Largest useful batch tile (multiple of 8 sublanes), but keep >= `min_steps`
    grid steps when the batch allows so v7x's second TensorCore isn't idle on the
    'parallel' axis.  On 1-TC chips the extra step costs ~0.35us -- negligible."""
    tb = min(block_b, _round_up(B, 8))
    tb = max(8, (tb // 8) * 8)
    if B > 8 and pl.cdiv(B, tb) < min_steps:
        tb = max(8, _round_up(pl.cdiv(B, min_steps), 8))
    return tb


def maml_forward(x, params, block_b=512):
    """x: (B, I); params: output of prepare_params. Returns (B, O) float32.

    For MAML with shared weights over T tasks, reshape (T, B, I) -> (T*B, I)
    before calling so one gridded pallas_call amortizes all launch overhead and
    keeps the weights VMEM-resident across the whole super-batch.
    """
    w1_t, b1_r, w2_t, b2_r = params
    compute_dtype = w1_t.dtype
    B, I = x.shape
    Hp = w1_t.shape[1]
    O = w2_t.shape[1]

    tb = _choose_batch_tile(B, block_b)
    Bp = _round_up(B, tb)
    if Bp != B:
        x = jnp.pad(x, ((0, Bp - B), (0, 0)))

    def resident(shape):
        # Same block every grid step -> weights/biases stay VMEM-resident.
        return pl.BlockSpec(shape, lambda i: (0, 0))

    out = pl.pallas_call(
        _make_mlp_kernel(compute_dtype),
        out_shape=jax.ShapeDtypeStruct((Bp, O), jnp.float32),
        grid_spec=pltpu.PrefetchScalarGridSpec(
            num_scalar_prefetch=0,
            grid=(Bp // tb,),
            in_specs=[
                pl.BlockSpec((tb, I), lambda i: (i, 0)),   # x tile (auto-pipelined)
                resident((I, Hp)),                         # w1 (in, hidden_p)
                resident((1, Hp)),                         # b1
                resident((Hp, O)),                         # w2 (hidden_p, out)
                resident((1, O)),                          # b2
            ],
            # Block last dim == full array dim (O) -> legal; narrow store trades a
            # few vst.msk ops for ~8x less HBM write traffic (mem-bound regime).
            out_specs=pl.BlockSpec((tb, O), lambda i: (i, 0)),
        ),
        compiler_params=pltpu.CompilerParams(
            dimension_semantics=("parallel",),             # shards batch across v7x's 2 TCs
        ),
    )(x, w1_t, b1_r, w2_t, b2_r)

    if Bp != B:
        out = out[:B]
    return out


def init_params(key, input_size, hidden_size, output_size):
    """Deterministic PyTorch-style init: U(-1/sqrt(fan_in), 1/sqrt(fan_in))."""
    k1, k2, k3, k4 = jax.random.split(key, 4)
    bound1 = 1.0 / jnp.sqrt(input_size)
    bound2 = 1.0 / jnp.sqrt(hidden_size)
    w1 = jax.random.uniform(k1, (hidden_size, input_size), jnp.float32, -bound1, bound1)
    b1 = jax.random.uniform(k2, (hidden_size,), jnp.float32, -bound1, bound1)
    w2 = jax.random.uniform(k3, (output_size, hidden_size), jnp.float32, -bound2, bound2)
    b2 = jax.random.uniform(k4, (output_size,), jnp.float32, -bound2, bound2)
    return w1, b1, w2, b2


if __name__ == "__main__":
    # Small shapes consistent with the module's MAML-style MLP forward.
    batch, input_size, hidden_size, output_size = 256, 32, 64, 16

    key = jax.random.PRNGKey(0)
    kx, kp = jax.random.split(key)
    x = jax.random.normal(kx, (batch, input_size), jnp.float32)
    w1, b1, w2, b2 = init_params(kp, input_size, hidden_size, output_size)

    # f32 operands by default (exact vs. PyTorch f32 forward); pass
    # operand_dtype=jnp.bfloat16 explicitly to halve weight/activation width
    # (f32 MXU accumulation either way, valid on v5e/v6e/v7x).
    params = prepare_params(w1, b1, w2, b2, operand_dtype=jnp.float32)

    out = maml_forward(x, params, block_b=512)
    out = jax.block_until_ready(out)

    # Pure-JAX f32 reference of the original module's forward.
    ref = jnp.maximum(x @ w1.T + b1, 0.0) @ w2.T + b2
    assert out.shape == (batch, output_size), out.shape
    assert jnp.allclose(out, ref, atol=1e-5, rtol=1e-5), float(jnp.max(jnp.abs(out - ref)))

    print("KERNEL_OK")
</pallas_src>

<mosaic_0001>
module attributes {stable_mosaic.version = 11 : i64} {
  func.func @mlp_kernel(%arg0: i32, %arg1: memref<128x32xf32, #tpu.memory_space<vmem>>, %arg2: memref<32x128xf32, #tpu.memory_space<vmem>>, %arg3: memref<1x128xf32, #tpu.memory_space<vmem>>, %arg4: memref<128x16xf32, #tpu.memory_space<vmem>>, %arg5: memref<1x16xf32, #tpu.memory_space<vmem>>, %arg6: memref<128x16xf32, #tpu.memory_space<vmem>>) attributes {dimension_semantics = [#tpu.dimension_semantics<parallel>], iteration_bounds = array<i64: 2>, scalar_prefetch = 0 : i64, scratch_operands = 0 : i64, tpu.core_type = #tpu.core_type<tc>, window_params = [{transform_indices = @transform_0, window_bounds = array<i64: 128, 32>}, {pipeline_mode = #tpu.pipeline_mode<synchronous>, transform_indices = @transform_1, window_bounds = array<i64: 32, 128>}, {pipeline_mode = #tpu.pipeline_mode<synchronous>, transform_indices = @transform_2, window_bounds = array<i64: 1, 128>}, {pipeline_mode = #tpu.pipeline_mode<synchronous>, transform_indices = @transform_3, window_bounds = array<i64: 128, 16>}, {pipeline_mode = #tpu.pipeline_mode<synchronous>, transform_indices = @transform_4, window_bounds = array<i64: 1, 16>}, {transform_indices = @transform_5, window_bounds = array<i64: 128, 16>}]} {
    %c0 = arith.constant 0 : index
    %c0_0 = arith.constant 0 : index
    %0 = vector.load %arg1[%c0, %c0_0] : memref<128x32xf32, #tpu.memory_space<vmem>>, vector<128x32xf32>
    %c0_1 = arith.constant 0 : index
    %c0_2 = arith.constant 0 : index
    %1 = vector.load %arg2[%c0_1, %c0_2] : memref<32x128xf32, #tpu.memory_space<vmem>>, vector<32x128xf32>
    %cst = arith.constant dense<0.000000e+00> : vector<128x128xf32>
    %2 = tpu.matmul %0, %1, %cst {dimension_numbers = #tpu.dot_dimension_numbers<[1], [0], [0], [1], [0, 0, 1, 1], [], []>} : vector<128x32xf32>, vector<32x128xf32>, vector<128x128xf32> -> vector<128x128xf32>
    %c0_3 = arith.constant 0 : index
    %c0_4 = arith.constant 0 : index
    %3 = vector.load %arg3[%c0_3, %c0_4] : memref<1x128xf32, #tpu.memory_space<vmem>>, vector<1x128xf32>
    %4 = vector.broadcast %3 : vector<1x128xf32> to vector<128x128xf32>
    %5 = arith.addf %2, %4 : vector<128x128xf32>
    %cst_5 = arith.constant 0.000000e+00 : f32
    %6 = vector.broadcast %cst_5 : f32 to vector<128x128xf32>
    %7 = arith.maximumf %5, %6 : vector<128x128xf32>
    %c0_6 = arith.constant 0 : index
    %c0_7 = arith.constant 0 : index
    %8 = vector.load %arg4[%c0_6, %c0_7] : memref<128x16xf32, #tpu.memory_space<vmem>>, vector<128x16xf32>
    %cst_8 = arith.constant dense<0.000000e+00> : vector<128x16xf32>
    %9 = tpu.matmul %7, %8, %cst_8 {dimension_numbers = #tpu.dot_dimension_numbers<[1], [0], [0], [1], [0, 0, 1, 1], [], []>} : vector<128x128xf32>, vector<128x16xf32>, vector<128x16xf32> -> vector<128x16xf32>
    %c0_9 = arith.constant 0 : index
    %c0_10 = arith.constant 0 : index
    %10 = vector.load %arg5[%c0_9, %c0_10] : memref<1x16xf32, #tpu.memory_space<vmem>>, vector<1x16xf32>
    %11 = vector.broadcast %10 : vector<1x16xf32> to vector<128x16xf32>
    %12 = arith.addf %9, %11 : vector<128x16xf32>
    %c0_11 = arith.constant 0 : index
    %c0_12 = arith.constant 0 : index
    %13 = vector.load %arg6[%c0_11, %c0_12] : memref<128x16xf32, #tpu.memory_space<vmem>>, vector<128x16xf32>
    tpu.vector_store %arg6[%c0_11, %c0_12], %12 {strides = array<i32>} : memref<128x16xf32, #tpu.memory_space<vmem>>, vector<128x16xf32>,
    return
  }
  func.func @transform_0(%arg0: i32) -> (i32, i32) {
    %c0_i32 = arith.constant 0 : i32
    %c0_i32_0 = arith.constant 0 : i32
    return %arg0, %c0_i32 : i32, i32
  }
  func.func @transform_1(%arg0: i32) -> (i32, i32) {
    %c0_i32 = arith.constant 0 : i32
    %c0_i32_0 = arith.constant 0 : i32
    %c0_i32_1 = arith.constant 0 : i32
    return %c0_i32, %c0_i32_0 : i32, i32
  }
  func.func @transform_2(%arg0: i32) -> (i32, i32) {
    %c0_i32 = arith.constant 0 : i32
    %c0_i32_0 = arith.constant 0 : i32
    %c0_i32_1 = arith.constant 0 : i32
    return %c0_i32, %c0_i32_0 : i32, i32
  }
  func.func @transform_3(%arg0: i32) -> (i32, i32) {
    %c0_i32 = arith.constant 0 : i32
    %c0_i32_0 = arith.constant 0 : i32
    %c0_i32_1 = arith.constant 0 : i32
    return %c0_i32, %c0_i32_0 : i32, i32
  }
  func.func @transform_4(%arg0: i32) -> (i32, i32) {
    %c0_i32 = arith.constant 0 : i32
    %c0_i32_0 = arith.constant 0 : i32
    %c0_i32_1 = arith.constant 0 : i32
    return %c0_i32, %c0_i32_0 : i32, i32
  }
  func.func @transform_5(%arg0: i32) -> (i32, i32) {
    %c0_i32 = arith.constant 0 : i32
    %c0_i32_0 = arith.constant 0 : i32
    return %arg0, %c0_i32 : i32, i32
  }
}

</mosaic_0001>

<llo_original>
// kernel: tpu_custom_call.1
$region0: #{tpu_custom_call.1}
  #allocation0 [shape = 'u32[]', space=smem, size = 0x4, offset = 0x4, fixed_abs, tag = 'smem constant byte address 0x4 - core index']
  #allocation1 [shape = 'u32[72,128]{1,0:T(1,128)}', space=vmem, size = 0x9000, scoped, tag = 'internal scratch']
  %s0 = inlined_call_operand.vmem [shape: f32[256,32], index: 0, kind: input, shape index: {}]
  %s1 = inlined_call_operand.vmem [shape: f32[32,128], index: 1, kind: input, shape index: {}]
  %s2 = inlined_call_operand.vmem [shape: f32[1,128], index: 2, kind: input, shape index: {}]
  %s3 = inlined_call_operand.vmem [shape: f32[128,16], index: 3, kind: input, shape index: {}]
  %s4 = inlined_call_operand.vmem [shape: f32[1,16], index: 4, kind: input, shape index: {}]
  %s5 = inlined_call_operand.vmem [shape: f32[256,16], index: 5, kind: output, shape index: {}]
  %s6 = sld [smem:[#allocation0]]
  $region53: #{tpu_custom_call.1} parent=0
    _
  %s8 = ssub.s32 1, %s6
  %s9 = scalar_select 0, %s8, %s6
  loop: start=0, step=1, limit=4
  $region2: #{tpu_custom_call.1} parent=0 // loop_pre_header
    _
  $region3: #{tpu_custom_call.1} parent=0 // loop_header
    %s11 = sphi 0, %s15
    %p12 = scmp.ge.s32.totalorder %s11, 4
    %s21 = sphi 0, %s23
    %s24 = sphi 0, %s21
    %s25 = sphi 0, %s24
    %s41 = sphi 0, %s25
    %s45 = sphi 0, %s45
    %s47 = sphi 0, %s45
    %s48 = sphi 0, %s47
    %s62 = sphi 0, %s48
    %s66 = sphi 0, %s66
    %s68 = sphi 0, %s66
    %s69 = sphi 0, %s68
    %s83 = sphi 0, %s69
    %s87 = sphi 0, %s87
    %s89 = sphi 0, %s87
    %s90 = sphi 0, %s89
    %s104 = sphi 0, %s90
    %s108 = sphi 0, %s108
    %s110 = sphi 0, %s108
    %s111 = sphi 0, %s110
    %s125 = sphi 0, %s111
    %s131 = sphi 0, %s133
    %s134 = sphi 0, %s131
    %s135 = sphi 0, %s134
    %s151 = sphi 0, %s135
  $region4: #{tpu_custom_call.1} parent=0 // loop_header_branch
    %14 = sbr.rel (%p12) target = $region8
  $region5: #{tpu_custom_call.1} parent=0 // loop_body
    %s16 = ssub.s32 %s11, 1
    %s17 = ssub.s32 %s11, 2
    %s18 = sadd.s32 %s11, 1
    %s19 = ssub.s32 %s11, %s18
    %p20 = scmp.eq.s32.totalorder %s19, 0
    %s22 = sadd.s32 %s21, 1
    %s23 = scalar_select %p20, %s21, %s22
    %p26 = pneg %p20
    %p27 = scmp.eq.s32.totalorder %s11, 1
    %p28 = por %p26, %p27
    %p29 = scmp.ne.s32.totalorder %s21, %s24
    %p30 = scmp.eq.s32.totalorder %s11, 0
    %p31 = por %p29, %p30
    %p32 = scmp.ne.s32.totalorder %s21, %s24
    %p33 = scmp.eq.s32.totalorder %s16, 1
    %p34 = por %p32, %p33
    %p35 = scmp.ne.s32.totalorder %s24, %s25
    %p36 = scmp.eq.s32.totalorder %s16, 0
    %p37 = por %p35, %p36
    %p38 = scmp.ne.s32.totalorder %s24, %s25
    %p39 = scmp.eq.s32.totalorder %s17, 1
    %p40 = por %p38, %p39
    %p42 = scmp.ne.s32.totalorder %s25, %s41
    %p43 = scmp.eq.s32.totalorder %s17, 0
    %p44 = por %p42, %p43
    %s46 = sadd.s32 %s45, 1
    %p49 = scmp.eq.s32.totalorder %s11, 1
    %p50 = scmp.ne.s32.totalorder %s45, %s47
    %p51 = scmp.eq.s32.totalorder %s11, 0
    %p52 = por %p50, %p51
    %p53 = scmp.ne.s32.totalorder %s45, %s47
    %p54 = scmp.eq.s32.totalorder %s16, 1
    %p55 = por %p53, %p54
    %p56 = scmp.ne.s32.totalorder %s47, %s48
    %p57 = scmp.eq.s32.totalorder %s16, 0
    %p58 = por %p56, %p57
    %p59 = scmp.ne.s32.totalorder %s47, %s48
    %p60 = scmp.eq.s32.totalorder %s17, 1
    %p61 = por %p59, %p60
    %p63 = scmp.ne.s32.totalorder %s48, %s62
    %p64 = scmp.eq.s32.totalorder %s17, 0
    %p65 = por %p63, %p64
    %s67 = sadd.s32 %s66, 1
    %p70 = scmp.eq.s32.totalorder %s11, 1
    %p71 = scmp.ne.s32.totalorder %s66, %s68
    %p72 = scmp.eq.s32.totalorder %s11, 0
    %p73 = por %p71, %p72
    %p74 = scmp.ne.s32.totalorder %s66, %s68
    %p75 = scmp.eq.s32.totalorder %s16, 1
    %p76 = por %p74, %p75
    %p77 = scmp.ne.s32.totalorder %s68, %s69
    %p78 = scmp.eq.s32.totalorder %s16, 0
    %p79 = por %p77, %p78
    %p80 = scmp.ne.s32.totalorder %s68, %s69
    %p81 = scmp.eq.s32.totalorder %s17, 1
    %p82 = por %p80, %p81
    %p84 = scmp.ne.s32.totalorder %s69, %s83
    %p85 = scmp.eq.s32.totalorder %s17, 0
    %p86 = por %p84, %p85
    %s88 = sadd.s32 %s87, 1
    %p91 = scmp.eq.s32.totalorder %s11, 1
    %p92 = scmp.ne.s32.totalorder %s87, %s89
    %p93 = scmp.eq.s32.totalorder %s11, 0
    %p94 = por %p92, %p93
    %p95 = scmp.ne.s32.totalorder %s87, %s89
    %p96 = scmp.eq.s32.totalorder %s16, 1
    %p97 = por %p95, %p96
    %p98 = scmp.ne.s32.totalorder %s89, %s90
    %p99 = scmp.eq.s32.totalorder %s16, 0
    %p100 = por %p98, %p99
    %p101 = scmp.ne.s32.totalorder %s89, %s90
    %p102 = scmp.eq.s32.totalorder %s17, 1
    %p103 = por %p101, %p102
    %p105 = scmp.ne.s32.totalorder %s90, %s104
    %p106 = scmp.eq.s32.totalorder %s17, 0
    %p107 = por %p105, %p106
    %s109 = sadd.s32 %s108, 1
    %p112 = scmp.eq.s32.totalorder %s11, 1
    %p113 = scmp.ne.s32.totalorder %s108, %s110
    %p114 = scmp.eq.s32.totalorder %s11, 0
    %p115 = por %p113, %p114
    %p116 = scmp.ne.s32.totalorder %s108, %s110
    %p117 = scmp.eq.s32.totalorder %s16, 1
    %p118 = por %p116, %p117
    %p119 = scmp.ne.s32.totalorder %s110, %s111
    %p120 = scmp.eq.s32.totalorder %s16, 0
    %p121 = por %p119, %p120
    %p122 = scmp.ne.s32.totalorder %s110, %s111
    %p123 = scmp.eq.s32.totalorder %s17, 1
    %p124 = por %p122, %p123
    %p126 = scmp.ne.s32.totalorder %s111, %s125
    %p127 = scmp.eq.s32.totalorder %s17, 0
    %p128 = por %p126, %p127
    %s129 = ssub.s32 %s11, %s18
    %p130 = scmp.eq.s32.totalorder %s129, 0
    %s132 = sadd.s32 %s131, 1
    %s133 = scalar_select %p130, %s131, %s132
    %p136 = pneg %p130
    %p137 = scmp.eq.s32.totalorder %s11, 1
    %p138 = por %p136, %p137
    %p139 = scmp.ne.s32.totalorder %s131, %s134
    %p140 = scmp.eq.s32.totalorder %s11, 0
    %p141 = por %p139, %p140
    %p142 = scmp.ne.s32.totalorder %s131, %s134
    %p143 = scmp.eq.s32.totalorder %s16, 1
    %p144 = por %p142, %p143
    %p145 = scmp.ne.s32.totalorder %s134, %s135
    %p146 = scmp.eq.s32.totalorder %s16, 0
    %p147 = por %p145, %p146
    %p148 = scmp.ne.s32.totalorder %s134, %s135
    %p149 = scmp.eq.s32.totalorder %s17, 1
    %p150 = por %p148, %p149
    %p152 = scmp.ne.s32.totalorder %s135, %s151
    %p153 = scmp.eq.s32.totalorder %s17, 0
    %p154 = por %p152, %p153
    %p155 = scmp.le.s32.totalorder 1, %s11
    %p156 = scmp.lt.s32.totalorder %s11, 3
    %p157 = pnand %p155, %p156
    %p158 = pneg %p157
    // Predicated region
    $region9: #{tpu_custom_call.1} parent=5 // pred_check
      _
    $region10: #{tpu_custom_call.1} parent=5 // pred_check_branch
      %160 = sbr.rel (%p157) target = $region12
    $region11: #{tpu_custom_call.1} parent=5 // pred_region
      %s161 = ssub.s32 %s11, 1
      // Predicated region
      $region13: #{tpu_custom_call.1} parent=11 // pred_check
        %p162 = pneg %p58
      $region14: #{tpu_custom_call.1} parent=11 // pred_check_branch
        %164 = sbr.rel (%p162) target = $region16
      $region15: #{tpu_custom_call.1} parent=11 // pred_region
        _
      $region16: #{tpu_custom_call.1} parent=11 // pred_fallthru
        _
      // Predicated region
      $region17: #{tpu_custom_call.1} parent=11 // pred_check
        %p165 = pneg %p79
      $region18: #{tpu_custom_call.1} parent=11 // pred_check_branch
        %167 = sbr.rel (%p165) target = $region20
      $region19: #{tpu_custom_call.1} parent=11 // pred_region
        _
      $region20: #{tpu_custom_call.1} parent=11 // pred_fallthru
        _
      // Predicated region
      $region21: #{tpu_custom_call.1} parent=11 // pred_check
        %p168 = pneg %p100
      $region22: #{tpu_custom_call.1} parent=11 // pred_check_branch
        %170 = sbr.rel (%p168) target = $region24
      $region23: #{tpu_custom_call.1} parent=11 // pred_region
        _
      $region24: #{tpu_custom_call.1} parent=11 // pred_fallthru
        _
      // Predicated region
      $region25: #{tpu_custom_call.1} parent=11 // pred_check
        %p171 = pneg %p121
      $region26: #{tpu_custom_call.1} parent=11 // pred_check_branch
        %173 = sbr.rel (%p171) target = $region28
      $region27: #{tpu_custom_call.1} parent=11 // pred_region
        _
      $region28: #{tpu_custom_call.1} parent=11 // pred_fallthru
        _
    $region12: #{tpu_custom_call.1} parent=5 // pred_fallthru
      _
    %p174 = scmp.lt.s32.totalorder %s11, 2
    // Predicated region
    $region29: #{tpu_custom_call.1} parent=5 // pred_check
      %p175 = pneg %p174
    $region30: #{tpu_custom_call.1} parent=5 // pred_check_branch
      %177 = sbr.rel (%p175) target = $region32
    $region31: #{tpu_custom_call.1} parent=5 // pred_region
      // Predicated region
      $region33: #{tpu_custom_call.1} parent=31 // pred_check
        %p178 = pneg %p31
      $region34: #{tpu_custom_call.1} parent=31 // pred_check_branch
        %180 = sbr.rel (%p178) target = $region36
      $region35: #{tpu_custom_call.1} parent=31 // pred_region
        %s181 = smul.u32 16, %s11
        %p182 = scmp.lt.s32.totalorder %s181, 31
        %s183 = scalar_select %p182, %s181, 31
        %s184 = smul.addr %s183, 8
        %s185 = scalar_lea.vmem %s0, %s184
        %s186 = smul.u32 16, %s11
      $region36: #{tpu_custom_call.1} parent=31 // pred_fallthru
        _
    $region32: #{tpu_custom_call.1} parent=5 // pred_fallthru
      _
    %p187 = scmp.le.s32.totalorder 1, %s11
    %p188 = scmp.lt.s32.totalorder %s11, 3
    %p189 = pnand %p187, %p188
    %p190 = pneg %p189
    // Predicated region
    $region37: #{tpu_custom_call.1} parent=5 // pred_check
      _
    $region38: #{tpu_custom_call.1} parent=5 // pred_check_branch
      %192 = sbr.rel (%p189) target = $region40
    $region39: #{tpu_custom_call.1} parent=5 // pred_region
      %s193 = ssub.s32 %s11, 1
      %s194 = smul.u32 16, %s16
      %p195 = scmp.lt.s32.totalorder %s194, 31
      %s196 = scalar_select %p195, %s194, 31
      %s197 = smul.addr %s196, 8
      %s198 = scalar_lea.vmem %s0, %s197
      %p199 = pneg %p37
      %p200 = pneg %p34
      %p201 = pneg %p58
      %p202 = pneg %p55
      %p203 = pneg %p79
      %p204 = pneg %p76
      %p205 = pneg %p100
      %p206 = pneg %p97
      %p207 = pneg %p121
      %p208 = pneg %p118
      %p209 = pneg %p147
      %p210 = pneg %p144
      %s211 = smul.u32 16, %s16
      %p212 = scmp.lt.s32.totalorder %s211, 31
      %s213 = scalar_select %p212, %s211, 31
      %s214 = smul.addr %s213, 8
      %s215 = scalar_lea.vmem %s5, %s214
      %s216 = smul.u32 16, %s16
      %p217 = scmp.lt.s32.totalorder %s216, 31
      %s218 = scalar_select %p217, %s216, 31
      %s219 = smul.addr %s218, 8
      %s220 = scalar_lea.vmem %s0, %s219
      %s221 = smul.u32 16, %s16
      %s222 = smul.u32 16, %s16
      %p223 = scmp.lt.s32.totalorder %s222, 31
      %s224 = scalar_select %p223, %s222, 31
      %s225 = smul.addr %s224, 8
      %s226 = scalar_lea.vmem %s5, %s225
      %s227 = smul.u32 16, %s16
      %v228 = vld [vmem:[%s220] sm:$0xff]
      %v229 = vld [vmem:[%s220 + $0x8] sm:$0xff]
      %v230 = vld [vmem:[%s220 + $0x10] sm:$0xff]
      %v231 = vld [vmem:[%s220 + $0x18] sm:$0xff]
      %v232 = vld [vmem:[%s220 + $0x20] sm:$0xff]
      %v233 = vld [vmem:[%s220 + $0x28] sm:$0xff]
      %v234 = vld [vmem:[%s220 + $0x30] sm:$0xff]
      %v235 = vld [vmem:[%s220 + $0x38] sm:$0xff]
      %v236 = vld [vmem:[%s220 + $0x40] sm:$0xff]
      %v237 = vld [vmem:[%s220 + $0x48] sm:$0xff]
      %v238 = vld [vmem:[%s220 + $0x50] sm:$0xff]
      %v239 = vld [vmem:[%s220 + $0x58] sm:$0xff]
      %v240 = vld [vmem:[%s220 + $0x60] sm:$0xff]
      %v241 = vld [vmem:[%s220 + $0x68] sm:$0xff]
      %v242 = vld [vmem:[%s220 + $0x70] sm:$0xff]
      %v243 = vld [vmem:[%s220 + $0x78] sm:$0xff]
      %v244 = vld [vmem:[%s1] sm:$0xff]
      %v245 = vld [vmem:[%s1 + $0x8] sm:$0xff]
      %v246 = vld [vmem:[%s1 + $0x10] sm:$0xff]
      %v247 = vld [vmem:[%s1 + $0x18] sm:$0xff]
      %v248 = vld [vmem:[%s2] sm:$0x1]
      %v250 = vperm.slane %v248, 0
      %vm252 = vcmask 261120
      %v254 = vsel %vm252, %v228, 0
      %v257 = vsel %vm252, %v229, 0
      %v260 = vsel %vm252, %v230, 0
      %v263 = vsel %vm252, %v231, 0
      %v266 = vsel %vm252, %v232, 0
      %v269 = vsel %vm252, %v233, 0
      %v272 = vsel %vm252, %v234, 0
      %v275 = vsel %vm252, %v235, 0
      %v278 = vsel %vm252, %v236, 0
      %v281 = vsel %vm252, %v237, 0
      %v284 = vsel %vm252, %v238, 0
      %v287 = vsel %vm252, %v239, 0
      %v290 = vsel %vm252, %v240, 0
      %v293 = vsel %vm252, %v241, 0
      %v296 = vsel %vm252, %v242, 0
      %v299 = vsel %vm252, %v243, 0
      %301 = vmatpush.msra.mxu0 0.0
      %302 = vmatpush.msra.mxu0 0.0
      %303 = vmatpush.msra.mxu0 0.0
      %304 = vmatpush.msra.mxu0 0.0
      %305 = vmatpush.msra.mxu0 0.0
      %306 = vmatpush.msra.mxu0 0.0
      %307 = vmatpush.msra.mxu0 0.0
      %308 = vmatpush.msra.mxu0 0.0
      %309 = vmatpush.msra.mxu0 0.0
      %310 = vmatpush.msra.mxu0 0.0
      %311 = vmatpush.msra.mxu0 0.0
      %312 = vmatpush.msra.mxu0 0.0
      %313 = vmatpush.msra.mxu0 %v247
      %314 = vmatpush.msra.mxu0 %v246
      %315 = vmatpush.msra.mxu0 %v245
      %316 = vmatpush.msra.mxu0 %v244
      %317 = vmatmul.f32.gmra.mxu0 %v254
      %v318 = vpop.f32.mrf.mxu0
      %v319 = vadd.f32 %v250, %v318
      %320 = vmatmul.f32.gmra.mxu0 %v257
      %v321 = vpop.f32.mrf.mxu0
      %v322 = vadd.f32 %v250, %v321
      %323 = vmatmul.f32.gmra.mxu0 %v260
      %v324 = vpop.f32.mrf.mxu0
      %v325 = vadd.f32 %v250, %v324
      %326 = vmatmul.f32.gmra.mxu0 %v263
      %v327 = vpop.f32.mrf.mxu0
      %v328 = vadd.f32 %v250, %v327
      %329 = vmatmul.f32.gmra.mxu0 %v266
      %v330 = vpop.f32.mrf.mxu0
      %v331 = vadd.f32 %v250, %v330
      %332 = vmatmul.f32.gmra.mxu0 %v269
      %v333 = vpop.f32.mrf.mxu0
      %v334 = vadd.f32 %v250, %v333
      %335 = vmatmul.f32.gmra.mxu0 %v272
      %v336 = vpop.f32.mrf.mxu0
      %v337 = vadd.f32 %v250, %v336
      %338 = vmatmul.f32.gmra.mxu0 %v275
      %v339 = vpop.f32.mrf.mxu0
      %v340 = vadd.f32 %v250, %v339
      %341 = vmatmul.f32.gmra.mxu0 %v278
      %v342 = vpop.f32.mrf.mxu0
      %v343 = vadd.f32 %v250, %v342
      %344 = vmatmul.f32.gmra.mxu0 %v281
      %v345 = vpop.f32.mrf.mxu0
      %v346 = vadd.f32 %v250, %v345
      %347 = vmatmul.f32.gmra.mxu0 %v284
      %v348 = vpop.f32.mrf.mxu0
      %v349 = vadd.f32 %v250, %v348
      %350 = vmatmul.f32.gmra.mxu0 %v287
      %v351 = vpop.f32.mrf.mxu0
      %v352 = vadd.f32 %v250, %v351
      %353 = vmatmul.f32.gmra.mxu0 %v290
      %v354 = vpop.f32.mrf.mxu0
      %v355 = vadd.f32 %v250, %v354
      %356 = vmatmul.f32.gmra.mxu0 %v293
      %v357 = vpop.f32.mrf.mxu0
      %v358 = vadd.f32 %v250, %v357
      %359 = vmatmul.f32.gmra.mxu0 %v296
      %v360 = vpop.f32.mrf.mxu0
      %v361 = vadd.f32 %v250, %v360
      %362 = vmatmul.f32.gmra.mxu0 %v299
      %v363 = vpop.f32.mrf.mxu0
      %v364 = vadd.f32 %v250, %v363
      %365 = vdwg.mxu0
      %v366 = vmax.f32 %v319, 0.0
      %v367 = vmax.f32 %v322, 0.0
      %v368 = vmax.f32 %v325, 0.0
      %v369 = vmax.f32 %v328, 0.0
      %v370 = vmax.f32 %v331, 0.0
      %v371 = vmax.f32 %v334, 0.0
      %v372 = vmax.f32 %v337, 0.0
      %v373 = vmax.f32 %v340, 0.0
      %v374 = vmax.f32 %v343, 0.0
      %v375 = vmax.f32 %v346, 0.0
      %v376 = vmax.f32 %v349, 0.0
      %v377 = vmax.f32 %v352, 0.0
      %v378 = vmax.f32 %v355, 0.0
      %v379 = vmax.f32 %v358, 0.0
      %v380 = vmax.f32 %v361, 0.0
      %v381 = vmax.f32 %v364, 0.0
      %v382 = vld [vmem:[%s3] sm:$0xff]
      %v383 = vld [vmem:[%s3 + $0x8] sm:$0xff]
      %v384 = vld [vmem:[%s3 + $0x10] sm:$0xff]
      %v385 = vld [vmem:[%s3 + $0x18] sm:$0xff]
      %v386 = vld [vmem:[%s3 + $0x20] sm:$0xff]
      %v387 = vld [vmem:[%s3 + $0x28] sm:$0xff]
      %v388 = vld [vmem:[%s3 + $0x30] sm:$0xff]
      %v389 = vld [vmem:[%s3 + $0x38] sm:$0xff]
      %v390 = vld [vmem:[%s3 + $0x40] sm:$0xff]
      %v391 = vld [vmem:[%s3 + $0x48] sm:$0xff]
      %v392 = vld [vmem:[%s3 + $0x50] sm:$0xff]
      %v393 = vld [vmem:[%s3 + $0x58] sm:$0xff]
      %v394 = vld [vmem:[%s3 + $0x60] sm:$0xff]
      %v395 = vld [vmem:[%s3 + $0x68] sm:$0xff]
      %v396 = vld [vmem:[%s3 + $0x70] sm:$0xff]
      %v397 = vld [vmem:[%s3 + $0x78] sm:$0xff]
      %v398 = vld [vmem:[%s4] sm:$0x1]
      %v400 = vperm.slane %v398, 0
      %402 = vmatpush.msra.mxu0 %v397
      %403 = vmatpush.msra.mxu0 %v396
      %404 = vmatpush.msra.mxu0 %v395
      %405 = vmatpush.msra.mxu0 %v394
      %406 = vmatpush.msra.mxu0 %v393
      %407 = vmatpush.msra.mxu0 %v392
      %408 = vmatpush.msra.mxu0 %v391
      %409 = vmatpush.msra.mxu0 %v390
      %410 = vmatpush.msra.mxu0 %v389
      %411 = vmatpush.msra.mxu0 %v388
      %412 = vmatpush.msra.mxu0 %v387
      %413 = vmatpush.msra.mxu0 %v386
      %414 = vmatpush.msra.mxu0 %v385
      %415 = vmatpush.msra.mxu0 %v384
      %416 = vmatpush.msra.mxu0 %v383
      %417 = vmatpush.msra.mxu0 %v382
      %418 = vmatmul.f32.gmra.mxu0 %v366
      %v419 = vpop.f32.mrf.mxu0
      %v420 = vadd.f32 %v400, %v419
      %421 = vmatmul.f32.gmra.mxu0 %v367
      %v422 = vpop.f32.mrf.mxu0
      %v423 = vadd.f32 %v400, %v422
      %424 = vmatmul.f32.gmra.mxu0 %v368
      %v425 = vpop.f32.mrf.mxu0
      %v426 = vadd.f32 %v400, %v425
      %427 = vmatmul.f32.gmra.mxu0 %v369
      %v428 = vpop.f32.mrf.mxu0
      %v429 = vadd.f32 %v400, %v428
      %430 = vmatmul.f32.gmra.mxu0 %v370
      %v431 = vpop.f32.mrf.mxu0
      %v432 = vadd.f32 %v400, %v431
      %433 = vmatmul.f32.gmra.mxu0 %v371
      %v434 = vpop.f32.mrf.mxu0
      %v435 = vadd.f32 %v400, %v434
      %436 = vmatmul.f32.gmra.mxu0 %v372
      %v437 = vpop.f32.mrf.mxu0
      %v438 = vadd.f32 %v400, %v437
      %439 = vmatmul.f32.gmra.mxu0 %v373
      %v440 = vpop.f32.mrf.mxu0
      %v441 = vadd.f32 %v400, %v440
      %442 = vmatmul.f32.gmra.mxu0 %v374
      %v443 = vpop.f32.mrf.mxu0
      %v444 = vadd.f32 %v400, %v443
      %445 = vmatmul.f32.gmra.mxu0 %v375
      %v446 = vpop.f32.mrf.mxu0
      %v447 = vadd.f32 %v400, %v446
      %448 = vmatmul.f32.gmra.mxu0 %v376
      %v449 = vpop.f32.mrf.mxu0
      %v450 = vadd.f32 %v400, %v449
      %451 = vmatmul.f32.gmra.mxu0 %v377
      %v452 = vpop.f32.mrf.mxu0
      %v453 = vadd.f32 %v400, %v452
      %454 = vmatmul.f32.gmra.mxu0 %v378
      %v455 = vpop.f32.mrf.mxu0
      %v456 = vadd.f32 %v400, %v455
      %457 = vmatmul.f32.gmra.mxu0 %v379
      %v458 = vpop.f32.mrf.mxu0
      %v459 = vadd.f32 %v400, %v458
      %460 = vmatmul.f32.gmra.mxu0 %v380
      %v461 = vpop.f32.mrf.mxu0
      %v462 = vadd.f32 %v400, %v461
      %463 = vmatmul.f32.gmra.mxu0 %v381
      %v464 = vpop.f32.mrf.mxu0
      %v465 = vadd.f32 %v400, %v464
      %466 = vdwg.mxu0
      %vm467 = vcmask 130048
      %468 = vst.msk [vmem:[%s226] sm:$0xff] %vm467, %v420
      %469 = vst.msk [vmem:[%s226 + $0x8] sm:$0xff] %vm467, %v423
      %470 = vst.msk [vmem:[%s226 + $0x10] sm:$0xff] %vm467, %v426
      %471 = vst.msk [vmem:[%s226 + $0x18] sm:$0xff] %vm467, %v429
      %472 = vst.msk [vmem:[%s226 + $0x20] sm:$0xff] %vm467, %v432
      %473 = vst.msk [vmem:[%s226 + $0x28] sm:$0xff] %vm467, %v435
      %474 = vst.msk [vmem:[%s226 + $0x30] sm:$0xff] %vm467, %v438
      %475 = vst.msk [vmem:[%s226 + $0x38] sm:$0xff] %vm467, %v441
      %476 = vst.msk [vmem:[%s226 + $0x40] sm:$0xff] %vm467, %v444
      %477 = vst.msk [vmem:[%s226 + $0x48] sm:$0xff] %vm467, %v447
      %478 = vst.msk [vmem:[%s226 + $0x50] sm:$0xff] %vm467, %v450
      %479 = vst.msk [vmem:[%s226 + $0x58] sm:$0xff] %vm467, %v453
      %480 = vst.msk [vmem:[%s226 + $0x60] sm:$0xff] %vm467, %v456
      %481 = vst.msk [vmem:[%s226 + $0x68] sm:$0xff] %vm467, %v459
      %482 = vst.msk [vmem:[%s226 + $0x70] sm:$0xff] %vm467, %v462
      %483 = vst.msk [vmem:[%s226 + $0x78] sm:$0xff] %vm467, %v465
      %s484 = smul.u32 16, %s16
      %p485 = scmp.lt.s32.totalorder %s484, 31
      %s486 = scalar_select %p485, %s484, 31
      %s487 = smul.addr %s486, 8
      %s488 = scalar_lea.vmem %s5, %s487
      // Predicated region
      $region41: #{tpu_custom_call.1} parent=39 // pred_check
        %p489 = pneg %p144
      $region42: #{tpu_custom_call.1} parent=39 // pred_check_branch
        %491 = sbr.rel (%p489) target = $region44
      $region43: #{tpu_custom_call.1} parent=39 // pred_region
        %s492 = smul.u32 16, %s16
      $region44: #{tpu_custom_call.1} parent=39 // pred_fallthru
        _
    $region40: #{tpu_custom_call.1} parent=5 // pred_fallthru
      _
    %p493 = scmp.le.s32.totalorder 2, %s11
    // Predicated region
    $region45: #{tpu_custom_call.1} parent=5 // pred_check
      %p494 = pneg %p493
    $region46: #{tpu_custom_call.1} parent=5 // pred_check_branch
      %496 = sbr.rel (%p494) target = $region48
    $region47: #{tpu_custom_call.1} parent=5 // pred_region
      %s497 = ssub.s32 %s11, 2
      // Predicated region
      $region49: #{tpu_custom_call.1} parent=47 // pred_check
        %p498 = pneg %p150
      $region50: #{tpu_custom_call.1} parent=47 // pred_check_branch
        %500 = sbr.rel (%p498) target = $region52
      $region51: #{tpu_custom_call.1} parent=47 // pred_region
        %s501 = smul.u32 16, %s17
        %p502 = scmp.lt.s32.totalorder %s501, 31
        %s503 = scalar_select %p502, %s501, 31
        %s504 = smul.addr %s503, 8
        %s505 = scalar_lea.vmem %s5, %s504
      $region52: #{tpu_custom_call.1} parent=47 // pred_fallthru
        _
    $region48: #{tpu_custom_call.1} parent=5 // pred_fallthru
      _
  $region6: #{tpu_custom_call.1} parent=0 // loop_footer
    %s15 = sadd.s32 1, %s11
  $region7: #{tpu_custom_call.1} parent=0 // loop_footer_branch
    %10 = sbr.rel target = $region3
  $region8: #{tpu_custom_call.1} parent=0 // loop_exit
    _

</llo_original>
